<compile_context>
chip_gen: v6e
topology: v6e:2x2x1
jax: 0.10.0
libtpu: 0.0.40
codegen_flags: <defaults>
</compile_context>

<pallas_src>
import jax
import jax.numpy as jnp
from jax.experimental import pallas as pl
from jax.experimental.pallas import tpu as pltpu


NEG_SLOPE = 0.01
BN_EPS = 1e-5


def _leaky_relu(x):
    return jnp.where(x > 0, x, NEG_SLOPE * x)


def critic_kernel(state_ref, action_ref,
                  w1_ref, p1_ref,          # W1 (D_in, FC1) bf16 ; p1 = [b1; gamma; beta] (3, FC1) f32
                  w2_ref, p2_ref,          # W2 (FC1, FC2) bf16 ; p2 = [b2; w3] (2, FC2) f32
                  b3_ref,                  # (1, 1) f32 in SMEM
                  out_ref,
                  x_ref):                  # (B, D_in) f32 VMEM staging tile
    d_state = state_ref.shape[1]
    d_in = x_ref.shape[1]

    # --- Stage the concatenated [state | action] LHS -> single fc1 matmul. ---
    x_ref[:, 0:d_state] = state_ref[...]
    x_ref[:, d_state:d_in] = action_ref[...].astype(jnp.float32)
    x = x_ref[...].astype(jnp.bfloat16)                          # (B, D_in)

    # fc1 + bias + leaky_relu (bf16 operands, f32 MXU accumulate).
    b1 = p1_ref[0:1, :]
    h1 = jnp.dot(x, w1_ref[...], preferred_element_type=jnp.float32)
    h1 = _leaky_relu(h1 + b1)                                    # (B, FC1) f32

    # BatchNorm1d (training mode), single-pass fused stats folded into one
    # h1 * scale + shift.  var clamped at 0 (E[x^2]-mean^2 cancellation guard).
    gamma = p1_ref[1:2, :]
    beta = p1_ref[2:3, :]
    b = h1.shape[0]
    inv_b = 1.0 / b
    mean = jnp.sum(h1, axis=0, keepdims=True) * inv_b            # (1, FC1)
    ex2 = jnp.sum(h1 * h1, axis=0, keepdims=True) * inv_b        # (1, FC1)
    var = jnp.maximum(ex2 - mean * mean, 0.0)
    scale = jax.lax.rsqrt(var + BN_EPS) * gamma                  # (1, FC1)
    shift = beta - mean * scale                                  # (1, FC1)
    h1n = h1 * scale + shift                                     # (B, FC1)

    # fc2 + leaky_relu.
    b2 = p2_ref[0:1, :]
    h2 = jnp.dot(h1n.astype(jnp.bfloat16), w2_ref[...],
                 preferred_element_type=jnp.float32)
    h2 = _leaky_relu(h2 + b2)                                    # (B, FC2) f32

    # fc3 -> Q-value.  N=1 matmul stays off the MXU: VPU multiply + lane reduce.
    w3 = p2_ref[1:2, :]
    q = jnp.sum(h2 * w3, axis=-1, keepdims=True)                 # (B, 1)
    out_ref[...] = q + b3_ref[0, 0]


@jax.jit
def critic_forward(state, action, params):
    w1, p1, w2, p2, b3 = params
    batch = state.shape[0]
    d_in = w1.shape[0]

    vmem = pl.BlockSpec(memory_space=pltpu.MemorySpace.VMEM)
    smem = pl.BlockSpec(memory_space=pltpu.MemorySpace.SMEM)
    return pl.pallas_call(
        critic_kernel,
        out_shape=jax.ShapeDtypeStruct((batch, 1), jnp.float32),
        in_specs=[vmem, vmem, vmem, vmem, vmem, vmem, smem],
        out_specs=vmem,
        scratch_shapes=[pltpu.VMEM((batch, d_in), jnp.float32)],
    )(state, action, w1, p1, w2, p2, b3)


def init_critic_params(key, state_size, action_size, num_agents,
                       fc1_units=512, fc2_units=256):
    d_state = state_size * num_agents
    d_action = action_size * num_agents
    d_in = d_state + d_action
    k1, k2, k3, k4, k5, k6 = jax.random.split(key, 6)

    def uniform(k, shape, lim):
        return jax.random.uniform(k, shape, jnp.float32, -lim, lim)

    # Weights stored as (in_features, out_features); matmul weights in bf16.
    # Ranges mirror the module's reset_parameters / PyTorch bias defaults
    # (deterministic synthetic init; not checkpoint-matched).
    lim1 = 1.0 / jnp.sqrt(jnp.float32(fc1_units))   # hidden_init: weight.size()[0] = out dim
    lim2 = 1.0 / jnp.sqrt(jnp.float32(fc2_units))
    w1 = uniform(k1, (d_in, fc1_units), lim1).astype(jnp.bfloat16)
    b1 = uniform(k2, (fc1_units,), 1.0 / jnp.sqrt(jnp.float32(d_in)))
    w2 = uniform(k3, (fc1_units, fc2_units), lim2).astype(jnp.bfloat16)
    b2 = uniform(k4, (fc2_units,), 1.0 / jnp.sqrt(jnp.float32(fc1_units)))
    w3 = uniform(k5, (fc2_units,), 0.003)            # fc3 stays f32 (VPU path)
    b3 = uniform(k6, (1, 1), 1.0 / jnp.sqrt(jnp.float32(fc2_units)))
    gamma = jnp.ones((fc1_units,), jnp.float32)      # fresh BatchNorm1d affine
    beta = jnp.zeros((fc1_units,), jnp.float32)

    p1 = jnp.stack([b1, gamma, beta], axis=0)        # (3, FC1) packed rows
    p2 = jnp.stack([b2, w3], axis=0)                 # (2, FC2) packed rows
    return (w1, p1, w2, p2, b3)


def reference_forward(state, action, params):
    """Pure-JAX reference (same bf16-operand / f32-accumulate precision recipe)."""
    w1, p1, w2, p2, b3 = params
    b1, gamma, beta = p1[0:1], p1[1:2], p1[2:3]
    b2, w3 = p2[0:1], p2[1:2]
    x = jnp.concatenate([state, action.astype(jnp.float32)],
                        axis=1).astype(jnp.bfloat16)
    h1 = _leaky_relu(jnp.dot(x, w1, preferred_element_type=jnp.float32) + b1)
    mean = jnp.mean(h1, axis=0, keepdims=True)
    var = jnp.mean((h1 - mean) ** 2, axis=0, keepdims=True)      # biased batch var
    h1n = (h1 - mean) * jax.lax.rsqrt(var + BN_EPS) * gamma + beta
    h2 = jnp.dot(h1n.astype(jnp.bfloat16), w2, preferred_element_type=jnp.float32)
    h2 = _leaky_relu(h2 + b2)
    return jnp.sum(h2 * w3, axis=-1, keepdims=True) + b3[0, 0]


if __name__ == "__main__":
    # Small shapes consistent with the module (hidden dims = module defaults,
    # which are MXU-lane friendly: 512 / 256).
    STATE_SIZE, ACTION_SIZE, NUM_AGENTS = 12, 4, 2
    FC1, FC2 = 512, 256
    BATCH = 8

    key = jax.random.PRNGKey(0)
    kp, ks, ka = jax.random.split(key, 3)

    params = init_critic_params(kp, STATE_SIZE, ACTION_SIZE, NUM_AGENTS,
                                fc1_units=FC1, fc2_units=FC2)
    state = jax.random.normal(ks, (BATCH, STATE_SIZE * NUM_AGENTS), jnp.float32)
    action = jax.random.normal(ka, (BATCH, ACTION_SIZE * NUM_AGENTS), jnp.float32)

    q = critic_forward(state, action, params)
    jax.block_until_ready(q)

    q_ref = reference_forward(state, action, params)
    assert q.shape == (BATCH, 1)
    assert jnp.allclose(q, q_ref, atol=5e-3, rtol=5e-3), (
        f"max abs diff {jnp.max(jnp.abs(q - q_ref))}")

    print("KERNEL_OK")
</pallas_src>

<mosaic_0001>
module attributes {stable_mosaic.version = 11 : i64} {
  func.func @critic_kernel(%arg0: memref<8x24xf32, #tpu.memory_space<vmem>>, %arg1: memref<8x8xf32, #tpu.memory_space<vmem>>, %arg2: memref<32x512xbf16, #tpu.memory_space<vmem>>, %arg3: memref<3x512xf32, #tpu.memory_space<vmem>>, %arg4: memref<512x256xbf16, #tpu.memory_space<vmem>>, %arg5: memref<2x256xf32, #tpu.memory_space<vmem>>, %arg6: memref<1x1xf32, #tpu.memory_space<smem>>, %arg7: memref<8x1xf32, #tpu.memory_space<vmem>>, %arg8: memref<8x32xf32, #tpu.memory_space<vmem>>) attributes {dimension_semantics = [], scalar_prefetch = 0 : i64, scratch_operands = 1 : i64, tpu.core_type = #tpu.core_type<tc>} {
    %c0 = arith.constant 0 : index
    %c0_0 = arith.constant 0 : index
    %0 = vector.load %arg0[%c0, %c0_0] : memref<8x24xf32, #tpu.memory_space<vmem>>, vector<8x24xf32>
    %c0_1 = arith.constant 0 : index
    %c0_2 = arith.constant 0 : index
    %1 = vector.load %arg8[%c0_1, %c0_2] : memref<8x32xf32, #tpu.memory_space<vmem>>, vector<8x24xf32>
    tpu.vector_store %arg8[%c0_1, %c0_2], %0 {strides = array<i32>} : memref<8x32xf32, #tpu.memory_space<vmem>>, vector<8x24xf32>,
    %c0_3 = arith.constant 0 : index
    %c0_4 = arith.constant 0 : index
    %2 = vector.load %arg1[%c0_3, %c0_4] : memref<8x8xf32, #tpu.memory_space<vmem>>, vector<8x8xf32>
    %c0_5 = arith.constant 0 : index
    %c24 = arith.constant 24 : index
    %3 = vector.load %arg8[%c0_5, %c24] : memref<8x32xf32, #tpu.memory_space<vmem>>, vector<8x8xf32>
    tpu.vector_store %arg8[%c0_5, %c24], %2 {strides = array<i32>} : memref<8x32xf32, #tpu.memory_space<vmem>>, vector<8x8xf32>,
    %c0_6 = arith.constant 0 : index
    %c0_7 = arith.constant 0 : index
    %4 = vector.load %arg8[%c0_6, %c0_7] : memref<8x32xf32, #tpu.memory_space<vmem>>, vector<8x32xf32>
    %5 = arith.truncf %4 : vector<8x32xf32> to vector<8x32xbf16>
    %c0_8 = arith.constant 0 : index
    %c0_9 = arith.constant 0 : index
    %6 = vector.load %arg3[%c0_8, %c0_9] : memref<3x512xf32, #tpu.memory_space<vmem>>, vector<1x512xf32>
    %c0_10 = arith.constant 0 : index
    %c0_11 = arith.constant 0 : index
    %7 = vector.load %arg2[%c0_10, %c0_11] : memref<32x512xbf16, #tpu.memory_space<vmem>>, vector<32x512xbf16>
    %cst = arith.constant dense<0.000000e+00> : vector<8x512xf32>
    %8 = tpu.matmul %5, %7, %cst {dimension_numbers = #tpu.dot_dimension_numbers<[1], [0], [0], [1], [0, 0, 1, 1], [], []>} : vector<8x32xbf16>, vector<32x512xbf16>, vector<8x512xf32> -> vector<8x512xf32>
    %9 = vector.broadcast %6 : vector<1x512xf32> to vector<8x512xf32>
    %10 = arith.addf %8, %9 : vector<8x512xf32>
    %cst_12 = arith.constant 0.000000e+00 : f32
    %11 = vector.broadcast %cst_12 : f32 to vector<8x512xf32>
    %12 = arith.cmpf ogt, %10, %11 : vector<8x512xf32>
    %cst_13 = arith.constant 0.00999999977 : f32
    %13 = vector.broadcast %cst_13 : f32 to vector<8x512xf32>
    %14 = arith.mulf %13, %10 : vector<8x512xf32>
    %15 = arith.select %12, %10, %14 : vector<8x512xi1>, vector<8x512xf32>
    %c1 = arith.constant 1 : index
    %c0_14 = arith.constant 0 : index
    %16 = vector.load %arg3[%c1, %c0_14] : memref<3x512xf32, #tpu.memory_space<vmem>>, vector<1x512xf32>
    %c2 = arith.constant 2 : index
    %c0_15 = arith.constant 0 : index
    %17 = vector.load %arg3[%c2, %c0_15] : memref<3x512xf32, #tpu.memory_space<vmem>>, vector<1x512xf32>
    %cst_16 = arith.constant dense<0.000000e+00> : vector<512xf32>
    %18 = vector.multi_reduction <add>, %15, %cst_16 [0] : vector<8x512xf32> to vector<512xf32>
    %19 = vector.shape_cast %18 : vector<512xf32> to vector<1x512xf32>
    %cst_17 = arith.constant 1.250000e-01 : f32
    %20 = vector.broadcast %cst_17 : f32 to vector<1x512xf32>
    %21 = arith.mulf %19, %20 : vector<1x512xf32>
    %22 = arith.mulf %15, %15 : vector<8x512xf32>
    %cst_18 = arith.constant dense<0.000000e+00> : vector<512xf32>
    %23 = vector.multi_reduction <add>, %22, %cst_18 [0] : vector<8x512xf32> to vector<512xf32>
    %24 = vector.shape_cast %23 : vector<512xf32> to vector<1x512xf32>
    %cst_19 = arith.constant 1.250000e-01 : f32
    %25 = vector.broadcast %cst_19 : f32 to vector<1x512xf32>
    %26 = arith.mulf %24, %25 : vector<1x512xf32>
    %27 = arith.mulf %21, %21 : vector<1x512xf32>
    %28 = arith.subf %26, %27 : vector<1x512xf32>
    %cst_20 = arith.constant 0.000000e+00 : f32
    %29 = vector.broadcast %cst_20 : f32 to vector<1x512xf32>
    %30 = arith.maximumf %28, %29 : vector<1x512xf32>
    %cst_21 = arith.constant 9.99999974E-6 : f32
    %31 = vector.broadcast %cst_21 : f32 to vector<1x512xf32>
    %32 = arith.addf %30, %31 : vector<1x512xf32>
    %33 = math.rsqrt %32 : vector<1x512xf32>
    %34 = arith.mulf %33, %16 : vector<1x512xf32>
    %35 = arith.mulf %21, %34 : vector<1x512xf32>
    %36 = arith.subf %17, %35 : vector<1x512xf32>
    %37 = vector.broadcast %34 : vector<1x512xf32> to vector<8x512xf32>
    %38 = arith.mulf %15, %37 : vector<8x512xf32>
    %39 = vector.broadcast %36 : vector<1x512xf32> to vector<8x512xf32>
    %40 = arith.addf %38, %39 : vector<8x512xf32>
    %c0_22 = arith.constant 0 : index
    %c0_23 = arith.constant 0 : index
    %41 = vector.load %arg5[%c0_22, %c0_23] : memref<2x256xf32, #tpu.memory_space<vmem>>, vector<1x256xf32>
    %42 = arith.truncf %40 : vector<8x512xf32> to vector<8x512xbf16>
    %c0_24 = arith.constant 0 : index
    %c0_25 = arith.constant 0 : index
    %43 = vector.load %arg4[%c0_24, %c0_25] : memref<512x256xbf16, #tpu.memory_space<vmem>>, vector<512x256xbf16>
    %cst_26 = arith.constant dense<0.000000e+00> : vector<8x256xf32>
    %44 = tpu.matmul %42, %43, %cst_26 {dimension_numbers = #tpu.dot_dimension_numbers<[1], [0], [0], [1], [0, 0, 1, 1], [], []>} : vector<8x512xbf16>, vector<512x256xbf16>, vector<8x256xf32> -> vector<8x256xf32>
    %45 = vector.broadcast %41 : vector<1x256xf32> to vector<8x256xf32>
    %46 = arith.addf %44, %45 : vector<8x256xf32>
    %cst_27 = arith.constant 0.000000e+00 : f32
    %47 = vector.broadcast %cst_27 : f32 to vector<8x256xf32>
    %48 = arith.cmpf ogt, %46, %47 : vector<8x256xf32>
    %cst_28 = arith.constant 0.00999999977 : f32
    %49 = vector.broadcast %cst_28 : f32 to vector<8x256xf32>
    %50 = arith.mulf %49, %46 : vector<8x256xf32>
    %51 = arith.select %48, %46, %50 : vector<8x256xi1>, vector<8x256xf32>
    %c1_29 = arith.constant 1 : index
    %c0_30 = arith.constant 0 : index
    %52 = vector.load %arg5[%c1_29, %c0_30] : memref<2x256xf32, #tpu.memory_space<vmem>>, vector<1x256xf32>
    %53 = vector.broadcast %52 : vector<1x256xf32> to vector<8x256xf32>
    %54 = arith.mulf %51, %53 : vector<8x256xf32>
    %cst_31 = arith.constant dense<0.000000e+00> : vector<8xf32>
    %55 = vector.multi_reduction <add>, %54, %cst_31 [1] : vector<8x256xf32> to vector<8xf32>
    %56 = vector.shape_cast %55 : vector<8xf32> to vector<8x1xf32>
    %c0_32 = arith.constant 0 : index
    %c0_33 = arith.constant 0 : index
    %57 = memref.load %arg6[%c0_32, %c0_33] : memref<1x1xf32, #tpu.memory_space<smem>>
    %58 = vector.broadcast %57 : f32 to vector<8x1xf32>
    %59 = arith.addf %56, %58 : vector<8x1xf32>
    %c0_34 = arith.constant 0 : index
    %c0_35 = arith.constant 0 : index
    %60 = vector.load %arg7[%c0_34, %c0_35] : memref<8x1xf32, #tpu.memory_space<vmem>>, vector<8x1xf32>
    tpu.vector_store %arg7[%c0_34, %c0_35], %59 {strides = array<i32>} : memref<8x1xf32, #tpu.memory_space<vmem>>, vector<8x1xf32>,
    return
  }
}

</mosaic_0001>

<llo_original>
// kernel: critic_forward.1
$region0: #{critic_forward.1}
  #allocation0 [shape = 'u32[]', space=smem, size = 0x4, offset = 0x4, fixed_abs, tag = 'smem constant byte address 0x4 - core index']
  #allocation1 [shape = 'u32[144,128]{1,0:T(1,128)}', space=vmem, size = 0x12000, scoped, tag = 'internal scratch']
  #allocation2 [shape = 'f32[8,32]{1,0:T(8,128)}', space=vmem, size = 0x1000, scoped, tag = 'scratch operand']
  #allocation3 [shape = 'f32[1,1]{1,0:T(1,128)S(6)}', space=smem, size = 0x200, scoped, tag = 'scoped memory for critic_forward.1']
  %s0 = inlined_call_operand.hbm [shape: f32[8,24], index: 0, kind: input, shape index: {}]
  %s1 = inlined_call_operand.hbm [shape: f32[8,8], index: 1, kind: input, shape index: {}]
  %s2 = inlined_call_operand.hbm [shape: bf16[32,512], index: 2, kind: input, shape index: {}]
  %s3 = inlined_call_operand.hbm [shape: f32[3,512], index: 3, kind: input, shape index: {}]
  %s4 = inlined_call_operand.hbm [shape: bf16[512,256], index: 4, kind: input, shape index: {}]
  %s5 = inlined_call_operand.vmem [shape: f32[2,256], index: 5, kind: input, shape index: {}]
  %s6 = inlined_call_operand.<no memory space> [shape: f32[1,1], index: 6, kind: input, shape index: {}]
  %s7 = inlined_call_operand.vmem [shape: f32[8,1], index: 7, kind: output, shape index: {}]
  %s8 = sld [smem:[#allocation0]]
  $region58: #{critic_forward.1} parent=0
    _
  %s10 = ssub.s32 1, %s8
  %s11 = scalar_select 0, %s10, %s8
  %12 = sst [smem:[#allocation3]] %s6
  $region1: #{critic_forward.1} parent=0
    #allocation4 [shape = 'u8[4096]{0}', space=vmem, size = 0x1000, scoped, tag = 'input window, operand 0, single buffered']
    #allocation5 [shape = 's32[1]{0}', space=sflag, size = 0x4, scoped, tag = 'scoped memory for critic_forward.1']
    #allocation6 [shape = 'u8[4096]{0}', space=vmem, size = 0x1000, scoped, tag = 'input window, operand 1, single buffered']
    #allocation7 [shape = 's32[1]{0}', space=sflag, size = 0x4, scoped, tag = 'scoped memory for critic_forward.1']
    #allocation8 [shape = 'u8[32768]{0}', space=vmem, size = 0x8000, scoped, tag = 'input window, operand 2, single buffered']
    #allocation9 [shape = 'u8[8192]{0}', space=vmem, size = 0x2000, scoped, tag = 'input window, operand 3, single buffered']
    #allocation10 [shape = 's32[1]{0}', space=sflag, size = 0x4, scoped, tag = 'scoped memory for critic_forward.1']
    #allocation11 [shape = 'u8[262144]{0}', space=vmem, size = 0x40000, scoped, tag = 'input window, operand 4, single buffered']
    %13 = vsyncpa [#allocation5], 0
    %14 = vsyncpa [#allocation7], 0
    %15 = vsyncpa [#allocation10], 0
    // Predicated region
    $region2: #{critic_forward.1} parent=1 // pred_check
      _
    $region3: #{critic_forward.1} parent=1 // pred_check_branch
      %17 = sbr.rel (0) target = $region5
    $region4: #{critic_forward.1} parent=1 // pred_region
      %s19 = ssub.s32 128, 128
      %20 = vsyncadd [#allocation5], %s19
      %s22 = sshll.u32 [#allocation4], 4
      %s23 = int_to_ptr.vmem [resolvable:$true] %s22
      %25 = dma.hbm_to_vmem [thread:$0]  %s0, 128, %s23, [#allocation5]
    $region5: #{critic_forward.1} parent=1 // pred_fallthru
      _
    // Predicated region
    $region6: #{critic_forward.1} parent=1 // pred_check
      _
    $region7: #{critic_forward.1} parent=1 // pred_check_branch
      %27 = sbr.rel (0) target = $region9
    $region8: #{critic_forward.1} parent=1 // pred_region
      %s29 = ssub.s32 128, 128
      %30 = vsyncadd [#allocation7], %s29
      %s32 = sshll.u32 [#allocation6], 4
      %s33 = int_to_ptr.vmem [resolvable:$true] %s32
      %35 = dma.hbm_to_vmem [thread:$0]  %s1, 128, %s33, [#allocation7]
    $region9: #{critic_forward.1} parent=1 // pred_fallthru
      _
    // Predicated region
    $region10: #{critic_forward.1} parent=1 // pred_check
      _
    $region11: #{critic_forward.1} parent=1 // pred_check_branch
      %37 = sbr.rel (0) target = $region13
    $region12: #{critic_forward.1} parent=1 // pred_region
      %s39 = ssub.s32 1024, 1024
      %40 = vsyncadd [#allocation7], %s39
      %s41 = sshll.u32 [#allocation8], 4
      %s42 = int_to_ptr.vmem [resolvable:$true] %s41
      %47 = dma.hbm_to_vmem [thread:$0]  %s2, 1024, %s42, [#allocation7], 256, 256, 16
    $region13: #{critic_forward.1} parent=1 // pred_fallthru
      _
    // Predicated region
    $region14: #{critic_forward.1} parent=1 // pred_check
      _
    $region15: #{critic_forward.1} parent=1 // pred_check_branch
      %49 = sbr.rel (0) target = $region17
    $region16: #{critic_forward.1} parent=1 // pred_region
      %s51 = ssub.s32 256, 256
      %52 = vsyncadd [#allocation10], %s51
      %s54 = sshll.u32 [#allocation9], 4
      %s55 = int_to_ptr.vmem [resolvable:$true] %s54
      %57 = dma.hbm_to_vmem [thread:$0]  %s3, 256, %s55, [#allocation10]
    $region17: #{critic_forward.1} parent=1 // pred_fallthru
      _
    // Predicated region
    $region18: #{critic_forward.1} parent=1 // pred_check
      _
    $region19: #{critic_forward.1} parent=1 // pred_check_branch
      %59 = sbr.rel (0) target = $region21
    $region20: #{critic_forward.1} parent=1 // pred_region
      %s61 = ssub.s32 8192, 8192
      %62 = vsyncadd [#allocation10], %s61
      %s63 = sshll.u32 [#allocation11], 4
      %s64 = int_to_ptr.vmem [resolvable:$true] %s63
      %69 = dma.hbm_to_vmem [thread:$0]  %s4, 8192, %s64, [#allocation10], 128, 128, 8
    $region21: #{critic_forward.1} parent=1 // pred_fallthru
      _
    // Predicated region
    $region22: #{critic_forward.1} parent=1 // pred_check
      _
    $region23: #{critic_forward.1} parent=1 // pred_check_branch
      %71 = sbr.rel (0) target = $region25
    $region24: #{critic_forward.1} parent=1 // pred_region
      _
    $region25: #{critic_forward.1} parent=1 // pred_fallthru
      _
    // Predicated region
    $region26: #{critic_forward.1} parent=1 // pred_check
      _
    $region27: #{critic_forward.1} parent=1 // pred_check_branch
      %73 = sbr.rel (0) target = $region29
    $region28: #{critic_forward.1} parent=1 // pred_region
      _
    $region29: #{critic_forward.1} parent=1 // pred_fallthru
      _
    // Predicated region
    $region30: #{critic_forward.1} parent=1 // pred_check
      _
    $region31: #{critic_forward.1} parent=1 // pred_check_branch
      %75 = sbr.rel (0) target = $region33
    $region32: #{critic_forward.1} parent=1 // pred_region
      %76 = dma.done [#allocation5], 128
    $region33: #{critic_forward.1} parent=1 // pred_fallthru
      _
    // Predicated region
    $region34: #{critic_forward.1} parent=1 // pred_check
      _
    $region35: #{critic_forward.1} parent=1 // pred_check_branch
      %78 = sbr.rel (0) target = $region37
    $region36: #{critic_forward.1} parent=1 // pred_region
      %79 = dma.done [#allocation7], 128
    $region37: #{critic_forward.1} parent=1 // pred_fallthru
      _
    // Predicated region
    $region38: #{critic_forward.1} parent=1 // pred_check
      _
    $region39: #{critic_forward.1} parent=1 // pred_check_branch
      %81 = sbr.rel (0) target = $region41
    $region40: #{critic_forward.1} parent=1 // pred_region
      %82 = dma.done [#allocation7], 1024
    $region41: #{critic_forward.1} parent=1 // pred_fallthru
      _
    // Predicated region
    $region42: #{critic_forward.1} parent=1 // pred_check
      _
    $region43: #{critic_forward.1} parent=1 // pred_check_branch
      %84 = sbr.rel (0) target = $region45
    $region44: #{critic_forward.1} parent=1 // pred_region
      %85 = dma.done [#allocation10], 256
    $region45: #{critic_forward.1} parent=1 // pred_fallthru
      _
    // Predicated region
    $region46: #{critic_forward.1} parent=1 // pred_check
      _
    $region47: #{critic_forward.1} parent=1 // pred_check_branch
      %87 = sbr.rel (0) target = $region49
    $region48: #{critic_forward.1} parent=1 // pred_region
      %88 = dma.done [#allocation10], 8192
    $region49: #{critic_forward.1} parent=1 // pred_fallthru
      _
    %v90 = vld [vmem:[#allocation4] sm:$0xff]
    %vm91 = vcmask 195584
    %92 = vst.msk [vmem:[#allocation2] sm:$0xff] %vm91, %v90
    %v93 = vld [vmem:[#allocation6] sm:$0xff]
    %95 = vrot.lane.b32.xlu0 %v93, 24
    %v96 = vpop.permute.xlu0 %95
    %vm98 = vcmask 261312
    %99 = vst.msk [vmem:[#allocation2] sm:$0xff] %vm98, %v96
    %v100 = vld [vmem:[#allocation2] sm:$0xff]
    %v101 = vpack.c.bf16 %v100, %v100
    %v102 = vld [vmem:[#allocation9] ss:$4 sm:$0xf]
    %v103 = vld [vmem:[#allocation8] sm:$0xff]
    %v104 = vld [vmem:[#allocation8 + $0x8] sm:$0xff]
    %v105 = vld [vmem:[#allocation8 + $0x10] sm:$0xff]
    %v106 = vld [vmem:[#allocation8 + $0x18] sm:$0xff]
    %v107 = vld [vmem:[#allocation8 + $0x20] sm:$0xff]
    %v108 = vld [vmem:[#allocation8 + $0x28] sm:$0xff]
    %v109 = vld [vmem:[#allocation8 + $0x30] sm:$0xff]
    %v110 = vld [vmem:[#allocation8 + $0x38] sm:$0xff]
    %v112 = vlaneseq
    %v113 = vshrl.u32 %v112, 7
    %v114 = vsub.s32 0, %v113
    %v115 = vrot.slane %v102, %v114
    %v116 = vlaneseq
    %v117 = vshrl.u32 %v116, 7
    %v118 = vsub.s32 1, %v117
    %v119 = vrot.slane %v102, %v118
    %v120 = vlaneseq
    %v121 = vshrl.u32 %v120, 7
    %v122 = vsub.s32 2, %v121
    %v123 = vrot.slane %v102, %v122
    %v124 = vlaneseq
    %v125 = vshrl.u32 %v124, 7
    %v126 = vsub.s32 3, %v125
    %v127 = vrot.slane %v102, %v126
    %v140 = vunpack.c.l.b16 %v103
    %v141 = vunpack.c.h.b16 %v103
    %v142 = vunpack.c.l.b16 %v104
    %v143 = vunpack.c.h.b16 %v104
    %v144 = vunpack.c.l.b16 %v105
    %v145 = vunpack.c.h.b16 %v105
    %v146 = vunpack.c.l.b16 %v106
    %v147 = vunpack.c.h.b16 %v106
    %v148 = vunpack.c.l.b16 %v107
    %v149 = vunpack.c.h.b16 %v107
    %v150 = vunpack.c.l.b16 %v108
    %v151 = vunpack.c.h.b16 %v108
    %v152 = vunpack.c.l.b16 %v109
    %v153 = vunpack.c.h.b16 %v109
    %v154 = vunpack.c.l.b16 %v110
    %v155 = vunpack.c.h.b16 %v110
    %v156 = vpack.c.b16 %v144, %v140
    %v157 = vpack.c.b16 %v145, %v141
    %v158 = vpack.c.b16 %v146, %v142
    %v159 = vpack.c.b16 %v147, %v143
    %v160 = vpack.c.b16 %v152, %v148
    %v161 = vpack.c.b16 %v153, %v149
    %v162 = vpack.c.b16 %v154, %v150
    %v163 = vpack.c.b16 %v155, %v151
    %vm172 = vcmask 261120
    %v174 = vsel %vm172, %v101, 0
    %176 = vmatprep.subr.bf16.mxu0 0
    %177 = vmatpush1.bf16.msra.mxu0 0
    %178 = vmatprep.subr.bf16.mxu0 0
    %179 = vmatpush1.bf16.msra.mxu0 0
    %180 = vmatprep.subr.bf16.mxu0 0
    %181 = vmatpush1.bf16.msra.mxu0 0
    %182 = vmatprep.subr.bf16.mxu0 0
    %183 = vmatpush1.bf16.msra.mxu0 0
    %184 = vmatprep.subr.bf16.mxu0 0
    %185 = vmatpush1.bf16.msra.mxu0 0
    %186 = vmatprep.subr.bf16.mxu0 0
    %187 = vmatpush1.bf16.msra.mxu0 0
    %188 = vmatprep.subr.bf16.mxu0 %v161
    %189 = vmatpush1.bf16.msra.mxu0 %v160
    %190 = vmatprep.subr.bf16.mxu0 %v157
    %191 = vmatpush1.bf16.msra.mxu0 %v156
    %192 = vmatprep.subr.bf16.mxu0 0
    %193 = vmatpush2.bf16.msra.mxu0 0
    %194 = vmatprep.subr.bf16.mxu0 0
    %195 = vmatpush2.bf16.msra.mxu0 0
    %196 = vmatprep.subr.bf16.mxu0 0
    %197 = vmatpush2.bf16.msra.mxu0 0
    %198 = vmatprep.subr.bf16.mxu0 0
    %199 = vmatpush2.bf16.msra.mxu0 0
    %200 = vmatprep.subr.bf16.mxu0 0
    %201 = vmatpush2.bf16.msra.mxu0 0
    %202 = vmatprep.subr.bf16.mxu0 0
    %203 = vmatpush2.bf16.msra.mxu0 0
    %204 = vmatprep.subr.bf16.mxu0 0
    %205 = vmatpush2.bf16.msra.mxu0 0
    %206 = vmatprep.subr.bf16.mxu0 0
    %207 = vmatpush2.bf16.msra.mxu0 0
    %208 = vmatprep.mubr.bf16.mxu0 0
    %209 = vmatmul.mubr.bf16.gmra.mxu0 %v174
    %v210 = vpop.f32.mrf.mxu0
    %v211 = vadd.f32 %v115, %v210
    %v212 = vpop.f32.mrf.mxu0
    %v213 = vadd.f32 %v119, %v212
    %v214 = vpop.f32.mrf.mxu0
    %v215 = vpop.f32.mrf.mxu0
    %216 = vdwg.mxu0
    %217 = vmatprep.subr.bf16.mxu0 0
    %218 = vmatpush1.bf16.msra.mxu0 0
    %219 = vmatprep.subr.bf16.mxu0 0
    %220 = vmatpush1.bf16.msra.mxu0 0
    %221 = vmatprep.subr.bf16.mxu0 0
    %222 = vmatpush1.bf16.msra.mxu0 0
    %223 = vmatprep.subr.bf16.mxu0 0
    %224 = vmatpush1.bf16.msra.mxu0 0
    %225 = vmatprep.subr.bf16.mxu0 0
    %226 = vmatpush1.bf16.msra.mxu0 0
    %227 = vmatprep.subr.bf16.mxu0 0
    %228 = vmatpush1.bf16.msra.mxu0 0
    %229 = vmatprep.subr.bf16.mxu0 %v163
    %230 = vmatpush1.bf16.msra.mxu0 %v162
    %231 = vmatprep.subr.bf16.mxu0 %v159
    %232 = vmatpush1.bf16.msra.mxu0 %v158
    %233 = vmatprep.subr.bf16.mxu0 0
    %234 = vmatpush2.bf16.msra.mxu0 0
    %235 = vmatprep.subr.bf16.mxu0 0
    %236 = vmatpush2.bf16.msra.mxu0 0
    %237 = vmatprep.subr.bf16.mxu0 0
    %238 = vmatpush2.bf16.msra.mxu0 0
    %239 = vmatprep.subr.bf16.mxu0 0
    %240 = vmatpush2.bf16.msra.mxu0 0
    %241 = vmatprep.subr.bf16.mxu0 0
    %242 = vmatpush2.bf16.msra.mxu0 0
    %243 = vmatprep.subr.bf16.mxu0 0
    %244 = vmatpush2.bf16.msra.mxu0 0
    %245 = vmatprep.subr.bf16.mxu0 0
    %246 = vmatpush2.bf16.msra.mxu0 0
    %247 = vmatprep.subr.bf16.mxu0 0
    %248 = vmatpush2.bf16.msra.mxu0 0
    %249 = vmatprep.mubr.bf16.mxu0 0
    %250 = vmatmul.mubr.bf16.gmra.mxu0 %v174
    %v251 = vpop.f32.mrf.mxu0
    %v252 = vadd.f32 %v123, %v251
    %v253 = vpop.f32.mrf.mxu0
    %v254 = vadd.f32 %v127, %v253
    %v255 = vpop.f32.mrf.mxu0
    %v256 = vpop.f32.mrf.mxu0
    %257 = vdwg.mxu0
    %vm258 = vcmp.gt.f32.partialorder %v211, 0.0
    %vm259 = vcmp.gt.f32.partialorder %v213, 0.0
    %vm260 = vcmp.gt.f32.partialorder %v252, 0.0
    %vm261 = vcmp.gt.f32.partialorder %v254, 0.0
    %v262 = vmul.f32 %v211, 0.01
    %v263 = vmul.f32 %v213, 0.01
    %v264 = vmul.f32 %v252, 0.01
    %v265 = vmul.f32 %v254, 0.01
    %v266 = vsel %vm258, %v211, %v262
    %v267 = vsel %vm259, %v213, %v263
    %v268 = vsel %vm260, %v252, %v264
    %v269 = vsel %vm261, %v254, %v265
    %s270 = scalar_lea.vmem [#allocation9], 1
    %v271 = vld [vmem:[%s270] ss:$4 sm:$0xf]
    %s272 = scalar_lea.vmem [#allocation9], 2
    %v273 = vld [vmem:[%s272] ss:$4 sm:$0xf]
    %v274 = vrot.slane %v266, 4
    %v275 = vadd.f32 %v266, %v274
    %v276 = vrot.slane %v275, 2
    %v277 = vadd.f32 %v275, %v276
    %v278 = vrot.slane %v277, 1
    %v279 = vadd.f32 %v277, %v278
    %v280 = vrot.slane %v267, 4
    %v281 = vadd.f32 %v267, %v280
    %v282 = vrot.slane %v281, 2
    %v283 = vadd.f32 %v281, %v282
    %v284 = vrot.slane %v283, 1
    %v285 = vadd.f32 %v283, %v284
    %v286 = vrot.slane %v268, 4
    %v287 = vadd.f32 %v268, %v286
    %v288 = vrot.slane %v287, 2
    %v289 = vadd.f32 %v287, %v288
    %v290 = vrot.slane %v289, 1
    %v291 = vadd.f32 %v289, %v290
    %v292 = vrot.slane %v269, 4
    %v293 = vadd.f32 %v269, %v292
    %v294 = vrot.slane %v293, 2
    %v295 = vadd.f32 %v293, %v294
    %v296 = vrot.slane %v295, 1
    %v297 = vadd.f32 %v295, %v296
    %v298 = vmul.f32 %v279, 0.125
    %v299 = vmul.f32 %v285, 0.125
    %v300 = vmul.f32 %v291, 0.125
    %v301 = vmul.f32 %v297, 0.125
    %v302 = vmul.f32 %v266, %v266
    %v303 = vmul.f32 %v267, %v267
    %v304 = vmul.f32 %v268, %v268
    %v305 = vmul.f32 %v269, %v269
    %v306 = vrot.slane %v302, 4
    %v307 = vadd.f32 %v302, %v306
    %v308 = vrot.slane %v307, 2
    %v309 = vadd.f32 %v307, %v308
    %v310 = vrot.slane %v309, 1
    %v311 = vadd.f32 %v309, %v310
    %v312 = vrot.slane %v303, 4
    %v313 = vadd.f32 %v303, %v312
    %v314 = vrot.slane %v313, 2
    %v315 = vadd.f32 %v313, %v314
    %v316 = vrot.slane %v315, 1
    %v317 = vadd.f32 %v315, %v316
    %v318 = vrot.slane %v304, 4
    %v319 = vadd.f32 %v304, %v318
    %v320 = vrot.slane %v319, 2
    %v321 = vadd.f32 %v319, %v320
    %v322 = vrot.slane %v321, 1
    %v323 = vadd.f32 %v321, %v322
    %v324 = vrot.slane %v305, 4
    %v325 = vadd.f32 %v305, %v324
    %v326 = vrot.slane %v325, 2
    %v327 = vadd.f32 %v325, %v326
    %v328 = vrot.slane %v327, 1
    %v329 = vadd.f32 %v327, %v328
    %v330 = vmul.f32 %v311, 0.125
    %v331 = vmul.f32 %v317, 0.125
    %v332 = vmul.f32 %v323, 0.125
    %v333 = vmul.f32 %v329, 0.125
    %v334 = vmul.f32 %v298, %v298
    %v335 = vmul.f32 %v299, %v299
    %v336 = vmul.f32 %v300, %v300
    %v337 = vmul.f32 %v301, %v301
    %v338 = vsub.f32 %v330, %v334
    %v339 = vsub.f32 %v331, %v335
    %v340 = vsub.f32 %v332, %v336
    %v341 = vsub.f32 %v333, %v337
    %v342 = vmax.f32 %v338, 0.0
    %v343 = vmax.f32 %v339, 0.0
    %v344 = vmax.f32 %v340, 0.0
    %v345 = vmax.f32 %v341, 0.0
    %v346 = vadd.f32 %v342, 1e-05
    %v347 = vadd.f32 %v343, 1e-05
    %v348 = vadd.f32 %v344, 1e-05
    %v349 = vadd.f32 %v345, 1e-05
    %v350 = vrsqrt.pop %v346
    %v351 = vrsqrt.pop %v347
    %v352 = vrsqrt.pop %v348
    %v353 = vrsqrt.pop %v349
    %v355 = vlaneseq
    %v356 = vshrl.u32 %v355, 7
    %v357 = vsub.s32 0, %v356
    %v358 = vrot.slane %v271, %v357
    %v359 = vlaneseq
    %v360 = vshrl.u32 %v359, 7
    %v361 = vsub.s32 1, %v360
    %v362 = vrot.slane %v271, %v361
    %v363 = vlaneseq
    %v364 = vshrl.u32 %v363, 7
    %v365 = vsub.s32 2, %v364
    %v366 = vrot.slane %v271, %v365
    %v367 = vlaneseq
    %v368 = vshrl.u32 %v367, 7
    %v369 = vsub.s32 3, %v368
    %v370 = vrot.slane %v271, %v369
    %v375 = vmul.f32 %v350, %v358
    %v376 = vmul.f32 %v351, %v362
    %v377 = vmul.f32 %v352, %v366
    %v378 = vmul.f32 %v353, %v370
    %v379 = vmul.f32 %v298, %v375
    %v380 = vmul.f32 %v299, %v376
    %v381 = vmul.f32 %v300, %v377
    %v382 = vmul.f32 %v301, %v378
    %v387 = vcombine.low %v379, %v380
    %v388 = vcombine.low %v381, %v382
    %v390 = vunpack.c.l.s4 1966171168
    %v391 = vunpack.c.0.s8 %v390
    %v392 = vlaneseq
    %v393 = vshrl.u32 %v392, 7
    %v394 = vsub.s32 %v391, %v393
    %v395 = vrot.slane %v387, %v394
    %v397 = vunpack.c.l.s4 1966171168
    %v398 = vunpack.c.0.s8 %v397
    %v399 = vlaneseq
    %v400 = vshrl.u32 %v399, 7
    %v401 = vsub.s32 %v398, %v400
    %v402 = vrot.slane %v388, %v401
    %v403 = vcombine.low %v395, %v402
    %v405 = vunpack.c.l.s4 1966171168
    %v406 = vunpack.c.0.s8 %v405
    %v407 = vlaneseq
    %v408 = vshrl.u32 %v407, 7
    %v409 = vsub.s32 %v406, %v408
    %v410 = vrot.slane %v403, %v409
    %v412 = vsub.f32 %v273, %v410
    %v413 = vlaneseq
    %v414 = vshrl.u32 %v413, 7
    %v415 = vsub.s32 0, %v414
    %v416 = vrot.slane %v375, %v415
    %v417 = vlaneseq
    %v418 = vshrl.u32 %v417, 7
    %v419 = vsub.s32 0, %v418
    %v420 = vrot.slane %v376, %v419
    %v421 = vlaneseq
    %v422 = vshrl.u32 %v421, 7
    %v423 = vsub.s32 0, %v422
    %v424 = vrot.slane %v377, %v423
    %v425 = vlaneseq
    %v426 = vshrl.u32 %v425, 7
    %v427 = vsub.s32 0, %v426
    %v428 = vrot.slane %v378, %v427
    %v429 = vmul.f32 %v266, %v416
    %v430 = vmul.f32 %v267, %v420
    %v431 = vmul.f32 %v268, %v424
    %v432 = vmul.f32 %v269, %v428
    %v434 = vlaneseq
    %v435 = vshrl.u32 %v434, 7
    %v436 = vsub.s32 0, %v435
    %v437 = vrot.slane %v412, %v436
    %v438 = vlaneseq
    %v439 = vshrl.u32 %v438, 7
    %v440 = vsub.s32 1, %v439
    %v441 = vrot.slane %v412, %v440
    %v442 = vlaneseq
    %v443 = vshrl.u32 %v442, 7
    %v444 = vsub.s32 2, %v443
    %v445 = vrot.slane %v412, %v444
    %v446 = vlaneseq
    %v447 = vshrl.u32 %v446, 7
    %v448 = vsub.s32 3, %v447
    %v449 = vrot.slane %v412, %v448
    %v454 = vadd.f32 %v429, %v437
    %v455 = vadd.f32 %v430, %v441
    %v456 = vadd.f32 %v431, %v445
    %v457 = vadd.f32 %v432, %v449
    %v458 = vld [vmem:[%s5] ss:$2 sm:$0x3]
    %v459 = vpack.c.bf16 %v454, %v454
    %v460 = vpack.c.bf16 %v455, %v455
    %v461 = vpack.c.bf16 %v456, %v456
    %v462 = vpack.c.bf16 %v457, %v457
    %v463 = vld [vmem:[#allocation11] sm:$0xff]
    %v464 = vld [vmem:[#allocation11 + $0x8] sm:$0xff]
    %v465 = vld [vmem:[#allocation11 + $0x10] sm:$0xff]
    %v466 = vld [vmem:[#allocation11 + $0x18] sm:$0xff]
    %v467 = vld [vmem:[#allocation11 + $0x20] sm:$0xff]
    %v468 = vld [vmem:[#allocation11 + $0x28] sm:$0xff]
    %v469 = vld [vmem:[#allocation11 + $0x30] sm:$0xff]
    %v470 = vld [vmem:[#allocation11 + $0x38] sm:$0xff]
    %v471 = vld [vmem:[#allocation11 + $0x40] sm:$0xff]
    %v472 = vld [vmem:[#allocation11 + $0x48] sm:$0xff]
    %v473 = vld [vmem:[#allocation11 + $0x50] sm:$0xff]
    %v474 = vld [vmem:[#allocation11 + $0x58] sm:$0xff]
    %v475 = vld [vmem:[#allocation11 + $0x60] sm:$0xff]
    %v476 = vld [vmem:[#allocation11 + $0x68] sm:$0xff]
    %v477 = vld [vmem:[#allocation11 + $0x70] sm:$0xff]
    %v478 = vld [vmem:[#allocation11 + $0x78] sm:$0xff]
    %v479 = vld [vmem:[#allocation11 + $0x80] sm:$0xff]
    %v480 = vld [vmem:[#allocation11 + $0x88] sm:$0xff]
    %v481 = vld [vmem:[#allocation11 + $0x90] sm:$0xff]
    %v482 = vld [vmem:[#allocation11 + $0x98] sm:$0xff]
    %v483 = vld [vmem:[#allocation11 + $0xa0] sm:$0xff]
    %v484 = vld [vmem:[#allocation11 + $0xa8] sm:$0xff]
    %v485 = vld [vmem:[#allocation11 + $0xb0] sm:$0xff]
    %v486 = vld [vmem:[#allocation11 + $0xb8] sm:$0xff]
    %v487 = vld [vmem:[#allocation11 + $0xc0] sm:$0xff]
    %v488 = vld [vmem:[#allocation11 + $0xc8] sm:$0xff]
    %v489 = vld [vmem:[#allocation11 + $0xd0] sm:$0xff]
    %v490 = vld [vmem:[#allocation11 + $0xd8] sm:$0xff]
    %v491 = vld [vmem:[#allocation11 + $0xe0] sm:$0xff]
    %v492 = vld [vmem:[#allocation11 + $0xe8] sm:$0xff]
    %v493 = vld [vmem:[#allocation11 + $0xf0] sm:$0xff]
    %v494 = vld [vmem:[#allocation11 + $0xf8] sm:$0xff]
    %v495 = vld [vmem:[#allocation11 + $0x100] sm:$0xff]
    %v496 = vld [vmem:[#allocation11 + $0x108] sm:$0xff]
    %v497 = vld [vmem:[#allocation11 + $0x110] sm:$0xff]
    %v498 = vld [vmem:[#allocation11 + $0x118] sm:$0xff]
    %v499 = vld [vmem:[#allocation11 + $0x120] sm:$0xff]
    %v500 = vld [vmem:[#allocation11 + $0x128] sm:$0xff]
    %v501 = vld [vmem:[#allocation11 + $0x130] sm:$0xff]
    %v502 = vld [vmem:[#allocation11 + $0x138] sm:$0xff]
    %v503 = vld [vmem:[#allocation11 + $0x140] sm:$0xff]
    %v504 = vld [vmem:[#allocation11 + $0x148] sm:$0xff]
    %v505 = vld [vmem:[#allocation11 + $0x150] sm:$0xff]
    %v506 = vld [vmem:[#allocation11 + $0x158] sm:$0xff]
    %v507 = vld [vmem:[#allocation11 + $0x160] sm:$0xff]
    %v508 = vld [vmem:[#allocation11 + $0x168] sm:$0xff]
    %v509 = vld [vmem:[#allocation11 + $0x170] sm:$0xff]
    %v510 = vld [vmem:[#allocation11 + $0x178] sm:$0xff]
    %v511 = vld [vmem:[#allocation11 + $0x180] sm:$0xff]
    %v512 = vld [vmem:[#allocation11 + $0x188] sm:$0xff]
    %v513 = vld [vmem:[#allocation11 + $0x190] sm:$0xff]
    %v514 = vld [vmem:[#allocation11 + $0x198] sm:$0xff]
    %v515 = vld [vmem:[#allocation11 + $0x1a0] sm:$0xff]
    %v516 = vld [vmem:[#allocation11 + $0x1a8] sm:$0xff]
    %v517 = vld [vmem:[#allocation11 + $0x1b0] sm:$0xff]
    %v518 = vld [vmem:[#allocation11 + $0x1b8] sm:$0xff]
    %v519 = vld [vmem:[#allocation11 + $0x1c0] sm:$0xff]
    %v520 = vld [vmem:[#allocation11 + $0x1c8] sm:$0xff]
    %v521 = vld [vmem:[#allocation11 + $0x1d0] sm:$0xff]
    %v522 = vld [vmem:[#allocation11 + $0x1d8] sm:$0xff]
    %v523 = vld [vmem:[#allocation11 + $0x1e0] sm:$0xff]
    %v524 = vld [vmem:[#allocation11 + $0x1e8] sm:$0xff]
    %v525 = vld [vmem:[#allocation11 + $0x1f0] sm:$0xff]
    %v526 = vld [vmem:[#allocation11 + $0x1f8] sm:$0xff]
    %v528 = vlaneseq
    %v529 = vshrl.u32 %v528, 7
    %v530 = vsub.s32 0, %v529
    %v531 = vrot.slane %v458, %v530
    %v532 = vlaneseq
    %v533 = vshrl.u32 %v532, 7
    %v534 = vsub.s32 1, %v533
    %v535 = vrot.slane %v458, %v534
    %v602 = vunpack.c.l.b16 %v463
    %v603 = vunpack.c.h.b16 %v463
    %v604 = vunpack.c.l.b16 %v464
    %v605 = vunpack.c.h.b16 %v464
    %v606 = vunpack.c.l.b16 %v465
    %v607 = vunpack.c.h.b16 %v465
    %v608 = vunpack.c.l.b16 %v466
    %v609 = vunpack.c.h.b16 %v466
    %v610 = vunpack.c.l.b16 %v467
    %v611 = vunpack.c.h.b16 %v467
    %v612 = vunpack.c.l.b16 %v468
    %v613 = vunpack.c.h.b16 %v468
    %v614 = vunpack.c.l.b16 %v469
    %v615 = vunpack.c.h.b16 %v469
    %v616 = vunpack.c.l.b16 %v470
    %v617 = vunpack.c.h.b16 %v470
    %v618 = vunpack.c.l.b16 %v471
    %v619 = vunpack.c.h.b16 %v471
    %v620 = vunpack.c.l.b16 %v472
    %v621 = vunpack.c.h.b16 %v472
    %v622 = vunpack.c.l.b16 %v473
    %v623 = vunpack.c.h.b16 %v473
    %v624 = vunpack.c.l.b16 %v474
    %v625 = vunpack.c.h.b16 %v474
    %v626 = vunpack.c.l.b16 %v475
    %v627 = vunpack.c.h.b16 %v475
    %v628 = vunpack.c.l.b16 %v476
    %v629 = vunpack.c.h.b16 %v476
    %v630 = vunpack.c.l.b16 %v477
    %v631 = vunpack.c.h.b16 %v477
    %v632 = vunpack.c.l.b16 %v478
    %v633 = vunpack.c.h.b16 %v478
    %v634 = vunpack.c.l.b16 %v479
    %v635 = vunpack.c.h.b16 %v479
    %v636 = vunpack.c.l.b16 %v480
    %v637 = vunpack.c.h.b16 %v480
    %v638 = vunpack.c.l.b16 %v481
    %v639 = vunpack.c.h.b16 %v481
    %v640 = vunpack.c.l.b16 %v482
    %v641 = vunpack.c.h.b16 %v482
    %v642 = vunpack.c.l.b16 %v483
    %v643 = vunpack.c.h.b16 %v483
    %v644 = vunpack.c.l.b16 %v484
    %v645 = vunpack.c.h.b16 %v484
    %v646 = vunpack.c.l.b16 %v485
    %v647 = vunpack.c.h.b16 %v485
    %v648 = vunpack.c.l.b16 %v486
    %v649 = vunpack.c.h.b16 %v486
    %v650 = vunpack.c.l.b16 %v487
    %v651 = vunpack.c.h.b16 %v487
    %v652 = vunpack.c.l.b16 %v488
    %v653 = vunpack.c.h.b16 %v488
    %v654 = vunpack.c.l.b16 %v489
    %v655 = vunpack.c.h.b16 %v489
    %v656 = vunpack.c.l.b16 %v490
    %v657 = vunpack.c.h.b16 %v490
    %v658 = vunpack.c.l.b16 %v491
    %v659 = vunpack.c.h.b16 %v491
    %v660 = vunpack.c.l.b16 %v492
    %v661 = vunpack.c.h.b16 %v492
    %v662 = vunpack.c.l.b16 %v493
    %v663 = vunpack.c.h.b16 %v493
    %v664 = vunpack.c.l.b16 %v494
    %v665 = vunpack.c.h.b16 %v494
    %v666 = vunpack.c.l.b16 %v495
    %v667 = vunpack.c.h.b16 %v495
    %v668 = vunpack.c.l.b16 %v496
    %v669 = vunpack.c.h.b16 %v496
    %v670 = vunpack.c.l.b16 %v497
    %v671 = vunpack.c.h.b16 %v497
    %v672 = vunpack.c.l.b16 %v498
    %v673 = vunpack.c.h.b16 %v498
    %v674 = vunpack.c.l.b16 %v499
    %v675 = vunpack.c.h.b16 %v499
    %v676 = vunpack.c.l.b16 %v500
    %v677 = vunpack.c.h.b16 %v500
    %v678 = vunpack.c.l.b16 %v501
    %v679 = vunpack.c.h.b16 %v501
    %v680 = vunpack.c.l.b16 %v502
    %v681 = vunpack.c.h.b16 %v502
    %v682 = vunpack.c.l.b16 %v503
    %v683 = vunpack.c.h.b16 %v503
    %v684 = vunpack.c.l.b16 %v504
    %v685 = vunpack.c.h.b16 %v504
    %v686 = vunpack.c.l.b16 %v505
    %v687 = vunpack.c.h.b16 %v505
    %v688 = vunpack.c.l.b16 %v506
    %v689 = vunpack.c.h.b16 %v506
    %v690 = vunpack.c.l.b16 %v507
    %v691 = vunpack.c.h.b16 %v507
    %v692 = vunpack.c.l.b16 %v508
    %v693 = vunpack.c.h.b16 %v508
    %v694 = vunpack.c.l.b16 %v509
    %v695 = vunpack.c.h.b16 %v509
    %v696 = vunpack.c.l.b16 %v510
    %v697 = vunpack.c.h.b16 %v510
    %v698 = vunpack.c.l.b16 %v511
    %v699 = vunpack.c.h.b16 %v511
    %v700 = vunpack.c.l.b16 %v512
    %v701 = vunpack.c.h.b16 %v512
    %v702 = vunpack.c.l.b16 %v513
    %v703 = vunpack.c.h.b16 %v513
    %v704 = vunpack.c.l.b16 %v514
    %v705 = vunpack.c.h.b16 %v514
    %v706 = vunpack.c.l.b16 %v515
    %v707 = vunpack.c.h.b16 %v515
    %v708 = vunpack.c.l.b16 %v516
    %v709 = vunpack.c.h.b16 %v516
    %v710 = vunpack.c.l.b16 %v517
    %v711 = vunpack.c.h.b16 %v517
    %v712 = vunpack.c.l.b16 %v518
    %v713 = vunpack.c.h.b16 %v518
    %v714 = vunpack.c.l.b16 %v519
    %v715 = vunpack.c.h.b16 %v519
    %v716 = vunpack.c.l.b16 %v520
    %v717 = vunpack.c.h.b16 %v520
    %v718 = vunpack.c.l.b16 %v521
    %v719 = vunpack.c.h.b16 %v521
    %v720 = vunpack.c.l.b16 %v522
    %v721 = vunpack.c.h.b16 %v522
    %v722 = vunpack.c.l.b16 %v523
    %v723 = vunpack.c.h.b16 %v523
    %v724 = vunpack.c.l.b16 %v524
    %v725 = vunpack.c.h.b16 %v524
    %v726 = vunpack.c.l.b16 %v525
    %v727 = vunpack.c.h.b16 %v525
    %v728 = vunpack.c.l.b16 %v526
    %v729 = vunpack.c.h.b16 %v526
    %v730 = vpack.c.b16 %v604, %v602
    %v731 = vpack.c.b16 %v605, %v603
    %v732 = vpack.c.b16 %v608, %v606
    %v733 = vpack.c.b16 %v609, %v607
    %v734 = vpack.c.b16 %v612, %v610
    %v735 = vpack.c.b16 %v613, %v611
    %v736 = vpack.c.b16 %v616, %v614
    %v737 = vpack.c.b16 %v617, %v615
    %v738 = vpack.c.b16 %v620, %v618
    %v739 = vpack.c.b16 %v621, %v619
    %v740 = vpack.c.b16 %v624, %v622
    %v741 = vpack.c.b16 %v625, %v623
    %v742 = vpack.c.b16 %v628, %v626
    %v743 = vpack.c.b16 %v629, %v627
    %v744 = vpack.c.b16 %v632, %v630
    %v745 = vpack.c.b16 %v633, %v631
    %v746 = vpack.c.b16 %v636, %v634
    %v747 = vpack.c.b16 %v637, %v635
    %v748 = vpack.c.b16 %v640, %v638
    %v749 = vpack.c.b16 %v641, %v639
    %v750 = vpack.c.b16 %v644, %v642
    %v751 = vpack.c.b16 %v645, %v643
    %v752 = vpack.c.b16 %v648, %v646
    %v753 = vpack.c.b16 %v649, %v647
    %v754 = vpack.c.b16 %v652, %v650
    %v755 = vpack.c.b16 %v653, %v651
    %v756 = vpack.c.b16 %v656, %v654
    %v757 = vpack.c.b16 %v657, %v655
    %v758 = vpack.c.b16 %v660, %v658
    %v759 = vpack.c.b16 %v661, %v659
    %v760 = vpack.c.b16 %v664, %v662
    %v761 = vpack.c.b16 %v665, %v663
    %v762 = vpack.c.b16 %v668, %v666
    %v763 = vpack.c.b16 %v669, %v667
    %v764 = vpack.c.b16 %v672, %v670
    %v765 = vpack.c.b16 %v673, %v671
    %v766 = vpack.c.b16 %v676, %v674
    %v767 = vpack.c.b16 %v677, %v675
    %v768 = vpack.c.b16 %v680, %v678
    %v769 = vpack.c.b16 %v681, %v679
    %v770 = vpack.c.b16 %v684, %v682
    %v771 = vpack.c.b16 %v685, %v683
    %v772 = vpack.c.b16 %v688, %v686
    %v773 = vpack.c.b16 %v689, %v687
    %v774 = vpack.c.b16 %v692, %v690
    %v775 = vpack.c.b16 %v693, %v691
    %v776 = vpack.c.b16 %v696, %v694
    %v777 = vpack.c.b16 %v697, %v695
    %v778 = vpack.c.b16 %v700, %v698
    %v779 = vpack.c.b16 %v701, %v699
    %v780 = vpack.c.b16 %v704, %v702
    %v781 = vpack.c.b16 %v705, %v703
    %v782 = vpack.c.b16 %v708, %v706
    %v783 = vpack.c.b16 %v709, %v707
    %v784 = vpack.c.b16 %v712, %v710
    %v785 = vpack.c.b16 %v713, %v711
    %v786 = vpack.c.b16 %v716, %v714
    %v787 = vpack.c.b16 %v717, %v715
    %v788 = vpack.c.b16 %v720, %v718
    %v789 = vpack.c.b16 %v721, %v719
    %v790 = vpack.c.b16 %v724, %v722
    %v791 = vpack.c.b16 %v725, %v723
    %v792 = vpack.c.b16 %v728, %v726
    %v793 = vpack.c.b16 %v729, %v727
    %858 = vmatprep.subr.bf16.mxu0 %v745
    %859 = vmatpush1.bf16.msra.mxu0 %v744
    %860 = vmatprep.subr.bf16.mxu0 %v743
    %861 = vmatpush1.bf16.msra.mxu0 %v742
    %862 = vmatprep.subr.bf16.mxu0 %v741
    %863 = vmatpush1.bf16.msra.mxu0 %v740
    %864 = vmatprep.subr.bf16.mxu0 %v739
    %865 = vmatpush1.bf16.msra.mxu0 %v738
    %866 = vmatprep.subr.bf16.mxu0 %v737
    %867 = vmatpush1.bf16.msra.mxu0 %v736
    %868 = vmatprep.subr.bf16.mxu0 %v735
    %869 = vmatpush1.bf16.msra.mxu0 %v734
    %870 = vmatprep.subr.bf16.mxu0 %v733
    %871 = vmatpush1.bf16.msra.mxu0 %v732
    %872 = vmatprep.subr.bf16.mxu0 %v731
    %873 = vmatpush1.bf16.msra.mxu0 %v730
    %874 = vmatprep.subr.bf16.mxu0 %v761
    %875 = vmatpush2.bf16.msra.mxu0 %v760
    %876 = vmatprep.subr.bf16.mxu0 %v759
    %877 = vmatpush2.bf16.msra.mxu0 %v758
    %878 = vmatprep.subr.bf16.mxu0 %v757
    %879 = vmatpush2.bf16.msra.mxu0 %v756
    %880 = vmatprep.subr.bf16.mxu0 %v755
    %881 = vmatpush2.bf16.msra.mxu0 %v754
    %882 = vmatprep.subr.bf16.mxu0 %v753
    %883 = vmatpush2.bf16.msra.mxu0 %v752
    %884 = vmatprep.subr.bf16.mxu0 %v751
    %885 = vmatpush2.bf16.msra.mxu0 %v750
    %886 = vmatprep.subr.bf16.mxu0 %v749
    %887 = vmatpush2.bf16.msra.mxu0 %v748
    %888 = vmatprep.subr.bf16.mxu0 %v747
    %889 = vmatpush2.bf16.msra.mxu0 %v746
    %890 = vmatprep.mubr.bf16.mxu0 %v460
    %891 = vmatmul.mubr.bf16.gmra.mxu0 %v459
    %v892 = vpop.f32.mrf.mxu0
    %v893 = vadd.f32 %v531, %v892
    %v894 = vpop.f32.mrf.mxu0
    %v895 = vadd.f32 %v535, %v894
    %v896 = vpop.f32.mrf.mxu0
    %v897 = vpop.f32.mrf.mxu0
    %898 = vdwg.mxu0
    %899 = vmatprep.subr.bf16.mxu0 %v777
    %900 = vmatpush1.bf16.msra.mxu0 %v776
    %901 = vmatprep.subr.bf16.mxu0 %v775
    %902 = vmatpush1.bf16.msra.mxu0 %v774
    %903 = vmatprep.subr.bf16.mxu0 %v773
    %904 = vmatpush1.bf16.msra.mxu0 %v772
    %905 = vmatprep.subr.bf16.mxu0 %v771
    %906 = vmatpush1.bf16.msra.mxu0 %v770
    %907 = vmatprep.subr.bf16.mxu0 %v769
    %908 = vmatpush1.bf16.msra.mxu0 %v768
    %909 = vmatprep.subr.bf16.mxu0 %v767
    %910 = vmatpush1.bf16.msra.mxu0 %v766
    %911 = vmatprep.subr.bf16.mxu0 %v765
    %912 = vmatpush1.bf16.msra.mxu0 %v764
    %913 = vmatprep.subr.bf16.mxu0 %v763
    %914 = vmatpush1.bf16.msra.mxu0 %v762
    %915 = vmatprep.subr.bf16.mxu0 %v793
    %916 = vmatpush2.bf16.msra.mxu0 %v792
    %917 = vmatprep.subr.bf16.mxu0 %v791
    %918 = vmatpush2.bf16.msra.mxu0 %v790
    %919 = vmatprep.subr.bf16.mxu0 %v789
    %920 = vmatpush2.bf16.msra.mxu0 %v788
    %921 = vmatprep.subr.bf16.mxu0 %v787
    %922 = vmatpush2.bf16.msra.mxu0 %v786
    %923 = vmatprep.subr.bf16.mxu0 %v785
    %924 = vmatpush2.bf16.msra.mxu0 %v784
    %925 = vmatprep.subr.bf16.mxu0 %v783
    %926 = vmatpush2.bf16.msra.mxu0 %v782
    %927 = vmatprep.subr.bf16.mxu0 %v781
    %928 = vmatpush2.bf16.msra.mxu0 %v780
    %929 = vmatprep.subr.bf16.mxu0 %v779
    %930 = vmatpush2.bf16.msra.mxu0 %v778
    %931 = vmatprep.mubr.bf16.mxu0 %v462
    %932 = vmatmul.mubr.bf16.gmra.mxu0 %v461
    %v933 = vpop.f32.mrf.mxu0
    %v934 = vadd.f32 %v893, %v933
    %v935 = vpop.f32.mrf.mxu0
    %v936 = vadd.f32 %v895, %v935
    %v937 = vpop.f32.mrf.mxu0
    %v938 = vpop.f32.mrf.mxu0
    %939 = vdwg.mxu0
    %vm940 = vcmp.gt.f32.partialorder %v934, 0.0
    %vm941 = vcmp.gt.f32.partialorder %v936, 0.0
    %v942 = vmul.f32 %v934, 0.01
    %v943 = vmul.f32 %v936, 0.01
    %v944 = vsel %vm940, %v934, %v942
    %v945 = vsel %vm941, %v936, %v943
    %s946 = scalar_lea.vmem %s5, 1
    %v947 = vld [vmem:[%s946] ss:$2 sm:$0x3]
    %v949 = vlaneseq
    %v950 = vshrl.u32 %v949, 7
    %v951 = vsub.s32 0, %v950
    %v952 = vrot.slane %v947, %v951
    %v953 = vlaneseq
    %v954 = vshrl.u32 %v953, 7
    %v955 = vsub.s32 1, %v954
    %v956 = vrot.slane %v947, %v955
    %v959 = vmul.f32 %v944, %v952
    %v960 = vmul.f32 %v945, %v956
    %v961 = vadd.f32 %v959, %v960
    %962 = vadd.xlane.f32.xlu0 %v961
    %v963 = vpop.xlane.xlu0 %962
    %s964 = sld [smem:[#allocation3]]
    %v965 = vstv %s964
    %v966 = vadd.f32 %v963, %v965
    %vm967 = vcmask 7168
    %968 = vst.msk [vmem:[%s7] sm:$0xff] %vm967, %v966
    // Predicated region
    $region50: #{critic_forward.1} parent=1 // pred_check
      _
    $region51: #{critic_forward.1} parent=1 // pred_check_branch
      %970 = sbr.rel (0) target = $region53
    $region52: #{critic_forward.1} parent=1 // pred_region
      _
    $region53: #{critic_forward.1} parent=1 // pred_fallthru
      _
    // Predicated region
    $region54: #{critic_forward.1} parent=1 // pred_check
      _
    $region55: #{critic_forward.1} parent=1 // pred_check_branch
      %972 = sbr.rel (0) target = $region57
    $region56: #{critic_forward.1} parent=1 // pred_region
      _
    $region57: #{critic_forward.1} parent=1 // pred_fallthru
      _
    %973 = vsyncpa [#allocation5], 1
    %974 = vsyncpa [#allocation7], 1
    %975 = vsyncpa [#allocation10], 1

</llo_original>
